<compile_context>
chip_gen: v5e
topology: v5e:2x2
jax: 0.10.0
libtpu: 0.0.40
codegen_flags: <defaults>
</compile_context>

<pallas_src>
import jax
import jax.numpy as jnp
from jax.experimental import pallas as pl
from jax.experimental.pallas import tpu as pltpu

_LANE = 128
_SUBLANE = 8


# ---------------------------------------------------------------------------
# Kernel: fused AttentionGRUCell step (single stacked matmul + activations).
#   x_ref : (bb, Kp)      == [ fact | C | 1 | 0-pad ]
#   c_ref : (bb, Hp)      == lane-padded C (for the gate blend / lane-dense out)
#   g_ref : (bb, 1)
#   w_ref : (Kp, 3*Hp)    == [[Wr^T | W^T | 0 ], [Ur^T | 0 | U^T], [b_r | b_w | b_u], [0]]
#   h_ref : (bb, Hp)      lane-dense padded output
# ---------------------------------------------------------------------------
def attention_gru_cell_kernel(x_ref, c_ref, g_ref, w_ref, h_ref):
    hp = w_ref.shape[1] // 3

    # One MXU pass produces all three gate pre-activations, biases included
    # (via the constant-1 column of x).
    z = jnp.dot(x_ref[...], w_ref[...],
                preferred_element_type=jnp.float32,
                precision=jax.lax.Precision.HIGHEST)

    # r = sigmoid(Wr(fact) + Ur(C) + b_wr + b_ur)
    r = jax.nn.sigmoid(z[:, :hp])
    # h~ = tanh(W(fact) + b_w + r * (U(C) + b_u))
    h_tilda = jnp.tanh(z[:, hp:2 * hp] + r * z[:, 2 * hp:])

    c = c_ref[...]
    g = g_ref[...]
    # h = g*h~ + (1-g)*C  ==  C + g*(h~ - C)
    h_ref[...] = c + g * (h_tilda - c)


# ---------------------------------------------------------------------------
# Weight preparation: fuse the four nn.Linear layers + biases into one slab.
#   PyTorch Linear weights are (out_features, in_features).
# ---------------------------------------------------------------------------
def fuse_attention_gru_params(wr_w, wr_b, ur_w, ur_b, w_w, w_b, u_w, u_b):
    hid, in_size = wr_w.shape
    hp = max(_LANE, ((hid + _LANE - 1) // _LANE) * _LANE)
    k = in_size + hid + 1                                  # [fact | C | 1]
    kp = ((k + _SUBLANE - 1) // _SUBLANE) * _SUBLANE       # sublane-align

    w = jnp.zeros((kp, 3 * hp), jnp.float32)
    # fact rows
    w = w.at[:in_size, 0:hid].set(wr_w.T)                  # r-gate, fact side
    w = w.at[:in_size, hp:hp + hid].set(w_w.T)             # candidate, fact side
    # C rows
    w = w.at[in_size:in_size + hid, 0:hid].set(ur_w.T)     # r-gate, C side
    w = w.at[in_size:in_size + hid, 2 * hp:2 * hp + hid].set(u_w.T)  # candidate, C side
    # bias row (hit by the constant-1 column of x)
    w = w.at[in_size + hid, 0:hid].set(wr_b + ur_b)
    w = w.at[in_size + hid, hp:hp + hid].set(w_b)
    w = w.at[in_size + hid, 2 * hp:2 * hp + hid].set(u_b)
    return w


def _pick_block_b(batch):
    """Full batch in one program unless per-program work clearly exceeds the
    ~0.35us per-grid-step overhead (only split at large, nicely divisible B)."""
    if batch < 512 or batch % 16 != 0:
        return batch
    return batch // 2


# ---------------------------------------------------------------------------
# Wrapper
# ---------------------------------------------------------------------------
def attention_gru_cell_pallas(fact, c, g, w_slab):
    """fact: (B, In), c: (B, H), g: (B,). Returns h: (B, H) f32."""
    batch, in_size = fact.shape
    hid = c.shape[1]
    kp = w_slab.shape[0]
    hp = w_slab.shape[1] // 3

    fact = fact.astype(jnp.float32)
    c = c.astype(jnp.float32)

    # Stacked, bias-augmented input [fact | C | 1 | 0-pad]  (cheap layout
    # plumbing outside the kernel; folds biases into the single matmul).
    x = jnp.zeros((batch, kp), jnp.float32)
    x = x.at[:, :in_size].set(fact)
    x = x.at[:, in_size:in_size + hid].set(c)
    x = x.at[:, in_size + hid].set(1.0)

    # Lane-padded previous state so the kernel's output store is lane-dense.
    c_pad = jnp.zeros((batch, hp), jnp.float32).at[:, :hid].set(c)
    g2 = g.reshape(batch, 1).astype(jnp.float32)

    block_b = _pick_block_b(batch)
    assert batch % block_b == 0
    grid = (batch // block_b,)

    h_pad = pl.pallas_call(
        attention_gru_cell_kernel,
        out_shape=jax.ShapeDtypeStruct((batch, hp), jnp.float32),
        grid_spec=pltpu.PrefetchScalarGridSpec(
            num_scalar_prefetch=0,
            grid=grid,
            in_specs=[
                pl.BlockSpec((block_b, kp), lambda i: (i, 0)),    # [fact|C|1]
                pl.BlockSpec((block_b, hp), lambda i: (i, 0)),    # padded C
                pl.BlockSpec((block_b, 1), lambda i: (i, 0)),     # g
                pl.BlockSpec((kp, 3 * hp), lambda i: (0, 0)),     # fused W slab
            ],
            out_specs=pl.BlockSpec((block_b, hp), lambda i: (i, 0)),
        ),
        compiler_params=pltpu.CompilerParams(
            dimension_semantics=("parallel",)),
    )(x, c_pad, g2, w_slab)

    return h_pad[:, :hid]


# ---------------------------------------------------------------------------
# Pure-JAX reference (mirrors the PyTorch forward exactly, f32 full precision)
# ---------------------------------------------------------------------------
def attention_gru_cell_ref(fact, c, g, raw_params):
    wr_w, wr_b, ur_w, ur_b, w_w, w_b, u_w, u_b = raw_params
    hi = jax.lax.Precision.HIGHEST
    r = jax.nn.sigmoid(jnp.dot(fact, wr_w.T, precision=hi) + wr_b
                       + jnp.dot(c, ur_w.T, precision=hi) + ur_b)
    h_tilda = jnp.tanh(jnp.dot(fact, w_w.T, precision=hi) + w_b
                       + r * (jnp.dot(c, u_w.T, precision=hi) + u_b))
    gg = g[:, None]
    return gg * h_tilda + (1.0 - gg) * c


# ---------------------------------------------------------------------------
# Deterministic parameter / input construction (matches PyTorch inits)
# ---------------------------------------------------------------------------
def _xavier_normal(key, out_features, in_features):
    std = (2.0 / (in_features + out_features)) ** 0.5
    return jax.random.normal(key, (out_features, in_features), jnp.float32) * std


def _linear_bias(key, in_features, out_features):
    bound = 1.0 / (in_features ** 0.5)   # PyTorch nn.Linear default bias init
    return jax.random.uniform(key, (out_features,), jnp.float32, -bound, bound)


if __name__ == "__main__":
    B, input_size, hidden_size = 16, 32, 32

    key = jax.random.PRNGKey(0)
    ks = jax.random.split(key, 11)

    wr_w = _xavier_normal(ks[0], hidden_size, input_size)
    wr_b = _linear_bias(ks[1], input_size, hidden_size)
    ur_w = _xavier_normal(ks[2], hidden_size, hidden_size)
    ur_b = _linear_bias(ks[3], hidden_size, hidden_size)
    w_w = _xavier_normal(ks[4], hidden_size, input_size)
    w_b = _linear_bias(ks[5], input_size, hidden_size)
    u_w = _xavier_normal(ks[6], hidden_size, hidden_size)
    u_b = _linear_bias(ks[7], hidden_size, hidden_size)
    raw_params = (wr_w, wr_b, ur_w, ur_b, w_w, w_b, u_w, u_b)

    fact = jax.random.normal(ks[8], (B, input_size), jnp.float32)
    C = jax.random.normal(ks[9], (B, hidden_size), jnp.float32)
    # attention gate g in [0, 1], shape (B,) as the PyTorch forward expects
    g = jax.nn.sigmoid(jax.random.normal(ks[10], (B,), jnp.float32))

    w_slab = fuse_attention_gru_params(*raw_params)

    h = attention_gru_cell_pallas(fact, C, g, w_slab)
    h = jax.block_until_ready(h)

    h_ref = attention_gru_cell_ref(fact, C, g, raw_params)

    assert h.shape == (B, hidden_size)
    assert h.dtype == jnp.float32
    max_diff = float(jnp.max(jnp.abs(h - h_ref)))
    assert bool(jnp.allclose(h, h_ref, atol=1e-3, rtol=1e-3)), max_diff
    print("KERNEL_OK")
</pallas_src>

<mosaic_0001>
module attributes {stable_mosaic.version = 11 : i64} {
  func.func @attention_gru_cell_kernel(%arg0: i32, %arg1: memref<16x72xf32, #tpu.memory_space<vmem>>, %arg2: memref<16x128xf32, #tpu.memory_space<vmem>>, %arg3: memref<16x1xf32, #tpu.memory_space<vmem>>, %arg4: memref<72x384xf32, #tpu.memory_space<vmem>>, %arg5: memref<16x128xf32, #tpu.memory_space<vmem>>) attributes {dimension_semantics = [#tpu.dimension_semantics<parallel>], iteration_bounds = array<i64: 1>, scalar_prefetch = 0 : i64, scratch_operands = 0 : i64, tpu.core_type = #tpu.core_type<tc>, window_params = [{transform_indices = @transform_0, window_bounds = array<i64: 16, 72>}, {transform_indices = @transform_1, window_bounds = array<i64: 16, 128>}, {transform_indices = @transform_2, window_bounds = array<i64: 16, 1>}, {pipeline_mode = #tpu.pipeline_mode<synchronous>, transform_indices = @transform_3, window_bounds = array<i64: 72, 384>}, {transform_indices = @transform_4, window_bounds = array<i64: 16, 128>}]} {
    %c0 = arith.constant 0 : index
    %c0_0 = arith.constant 0 : index
    %0 = vector.load %arg1[%c0, %c0_0] : memref<16x72xf32, #tpu.memory_space<vmem>>, vector<16x72xf32>
    %c0_1 = arith.constant 0 : index
    %c0_2 = arith.constant 0 : index
    %1 = vector.load %arg4[%c0_1, %c0_2] : memref<72x384xf32, #tpu.memory_space<vmem>>, vector<72x384xf32>
    %cst = arith.constant dense<0.000000e+00> : vector<16x384xf32>
    %2 = tpu.matmul %0, %1, %cst {dimension_numbers = #tpu.dot_dimension_numbers<[1], [0], [0], [1], [0, 0, 1, 1], [], []>, precision = #tpu.contract_precision<fp32>} : vector<16x72xf32>, vector<72x384xf32>, vector<16x384xf32> -> vector<16x384xf32>
    %3 = vector.extract_strided_slice %2 {offsets = [0, 0], sizes = [16, 128], strides = [1, 1]} : vector<16x384xf32> to vector<16x128xf32>
    %4 = arith.negf %3 : vector<16x128xf32>
    %5 = math.exp %4 : vector<16x128xf32>
    %cst_3 = arith.constant 1.000000e+00 : f32
    %6 = vector.broadcast %cst_3 : f32 to vector<16x128xf32>
    %7 = arith.addf %6, %5 : vector<16x128xf32>
    %8 = arith.divf %6, %7 : vector<16x128xf32>
    %9 = vector.extract_strided_slice %2 {offsets = [0, 128], sizes = [16, 128], strides = [1, 1]} : vector<16x384xf32> to vector<16x128xf32>
    %10 = vector.extract_strided_slice %2 {offsets = [0, 256], sizes = [16, 128], strides = [1, 1]} : vector<16x384xf32> to vector<16x128xf32>
    %11 = arith.mulf %8, %10 : vector<16x128xf32>
    %12 = arith.addf %9, %11 : vector<16x128xf32>
    %13 = math.tanh %12 : vector<16x128xf32>
    %c0_4 = arith.constant 0 : index
    %c0_5 = arith.constant 0 : index
    %14 = vector.load %arg2[%c0_4, %c0_5] : memref<16x128xf32, #tpu.memory_space<vmem>>, vector<16x128xf32>
    %c0_6 = arith.constant 0 : index
    %c0_7 = arith.constant 0 : index
    %15 = vector.load %arg3[%c0_6, %c0_7] : memref<16x1xf32, #tpu.memory_space<vmem>>, vector<16x1xf32>
    %16 = arith.subf %13, %14 : vector<16x128xf32>
    %17 = vector.broadcast %15 : vector<16x1xf32> to vector<16x128xf32>
    %18 = arith.mulf %17, %16 : vector<16x128xf32>
    %19 = arith.addf %14, %18 : vector<16x128xf32>
    %c0_8 = arith.constant 0 : index
    %c0_9 = arith.constant 0 : index
    %20 = vector.load %arg5[%c0_8, %c0_9] : memref<16x128xf32, #tpu.memory_space<vmem>>, vector<16x128xf32>
    tpu.vector_store %arg5[%c0_8, %c0_9], %19 {strides = array<i32>} : memref<16x128xf32, #tpu.memory_space<vmem>>, vector<16x128xf32>,
    return
  }
  func.func @transform_0(%arg0: i32) -> (i32, i32) {
    %c0_i32 = arith.constant 0 : i32
    %c0_i32_0 = arith.constant 0 : i32
    return %arg0, %c0_i32 : i32, i32
  }
  func.func @transform_1(%arg0: i32) -> (i32, i32) {
    %c0_i32 = arith.constant 0 : i32
    %c0_i32_0 = arith.constant 0 : i32
    return %arg0, %c0_i32 : i32, i32
  }
  func.func @transform_2(%arg0: i32) -> (i32, i32) {
    %c0_i32 = arith.constant 0 : i32
    %c0_i32_0 = arith.constant 0 : i32
    return %arg0, %c0_i32 : i32, i32
  }
  func.func @transform_3(%arg0: i32) -> (i32, i32) {
    %c0_i32 = arith.constant 0 : i32
    %c0_i32_0 = arith.constant 0 : i32
    %c0_i32_1 = arith.constant 0 : i32
    return %c0_i32, %c0_i32_0 : i32, i32
  }
  func.func @transform_4(%arg0: i32) -> (i32, i32) {
    %c0_i32 = arith.constant 0 : i32
    %c0_i32_0 = arith.constant 0 : i32
    return %arg0, %c0_i32 : i32, i32
  }
}

</mosaic_0001>

<llo_original>
// kernel: tpu_custom_call.1
$region0: #{tpu_custom_call.1}
  #allocation0 [shape = 'u32[]', space=smem, size = 0x4, offset = 0x4, fixed_abs, tag = 'smem constant byte address 0x4 - core index']
  #allocation1 [shape = 'u32[72,128]{1,0:T(1,128)}', space=vmem, size = 0x9000, scoped, tag = 'internal scratch']
  %s0 = inlined_call_operand.vmem [shape: f32[16,72], index: 0, kind: input, shape index: {}]
  %s1 = inlined_call_operand.hbm [shape: f32[16,128], index: 1, kind: input, shape index: {}]
  %s2 = inlined_call_operand.vmem [shape: f32[16,1], index: 2, kind: input, shape index: {}]
  %s3 = inlined_call_operand.hbm [shape: f32[72,384], index: 3, kind: input, shape index: {}]
  %s4 = inlined_call_operand.hbm [shape: f32[16,128], index: 4, kind: output, shape index: {}]
  %s5 = sld [smem:[#allocation0]]
  $region34: #{tpu_custom_call.1} parent=0
    _
  %s7 = ssub.s32 1, %s5
  %s8 = scalar_select 0, %s7, %s5
  $region1: #{tpu_custom_call.1} parent=0
    #allocation2 [shape = 'u8[8192]{0}', space=vmem, size = 0x2000, scoped, tag = 'input window, operand 1, single buffered']
    #allocation3 [shape = 's32[1]{0}', space=sflag, size = 0x4, scoped, tag = 'scoped memory for tpu_custom_call.1']
    #allocation4 [shape = 's32[1]{0}', space=sflag, size = 0x4, scoped, tag = 'scoped memory for tpu_custom_call.1']
    #allocation5 [shape = 'u8[110592]{0}', space=vmem, size = 0x1b000, scoped, tag = 'input window, operand 3, single buffered']
    #allocation6 [shape = 's32[1]{0}', space=sflag, size = 0x4, scoped, tag = 'scoped memory for tpu_custom_call.1']
    #allocation7 [shape = 'u8[8192]{0}', space=vmem, size = 0x2000, scoped, tag = 'output window, operand 0, single buffered']
    %9 = vsyncpa [#allocation3], 0
    %10 = vsyncpa [#allocation6], 0
    %11 = vsyncpa [#allocation4], 0
    // Predicated region
    $region2: #{tpu_custom_call.1} parent=1 // pred_check
      _
    $region3: #{tpu_custom_call.1} parent=1 // pred_check_branch
      %13 = sbr.rel (0) target = $region5
    $region4: #{tpu_custom_call.1} parent=1 // pred_region
      _
    $region5: #{tpu_custom_call.1} parent=1 // pred_fallthru
      _
    // Predicated region
    $region6: #{tpu_custom_call.1} parent=1 // pred_check
      _
    $region7: #{tpu_custom_call.1} parent=1 // pred_check_branch
      %15 = sbr.rel (0) target = $region9
    $region8: #{tpu_custom_call.1} parent=1 // pred_region
      %17 = vsyncadd [#allocation3], 0
      %s18 = sshll.u32 %s1, 4
      %s19 = int_to_ptr.hbm [resolvable:$true] %s18
      %s20 = sshll.u32 [#allocation2], 4
      %s21 = int_to_ptr.vmem [resolvable:$true] %s20
      %26 = dma.hbm_to_vmem [thread:$0]  %s19, 256, %s21, [#allocation3], 128, 128, 8
    $region9: #{tpu_custom_call.1} parent=1 // pred_fallthru
      _
    // Predicated region
    $region10: #{tpu_custom_call.1} parent=1 // pred_check
      _
    $region11: #{tpu_custom_call.1} parent=1 // pred_check_branch
      %28 = sbr.rel (0) target = $region13
    $region12: #{tpu_custom_call.1} parent=1 // pred_region
      _
    $region13: #{tpu_custom_call.1} parent=1 // pred_fallthru
      _
    // Predicated region
    $region14: #{tpu_custom_call.1} parent=1 // pred_check
      _
    $region15: #{tpu_custom_call.1} parent=1 // pred_check_branch
      %30 = sbr.rel (0) target = $region17
    $region16: #{tpu_custom_call.1} parent=1 // pred_region
      %32 = vsyncadd [#allocation6], 0
      %s33 = sshll.u32 %s3, 4
      %s34 = int_to_ptr.hbm [resolvable:$true] %s33
      %s35 = sshll.u32 [#allocation5], 4
      %s36 = int_to_ptr.vmem [resolvable:$true] %s35
      %41 = dma.hbm_to_vmem [thread:$0]  %s34, 3456, %s36, [#allocation6], 384, 384, 24
    $region17: #{tpu_custom_call.1} parent=1 // pred_fallthru
      _
    // Predicated region
    $region18: #{tpu_custom_call.1} parent=1 // pred_check
      _
    $region19: #{tpu_custom_call.1} parent=1 // pred_check_branch
      %43 = sbr.rel (0) target = $region21
    $region20: #{tpu_custom_call.1} parent=1 // pred_region
      %45 = dma.done [#allocation3], 256
    $region21: #{tpu_custom_call.1} parent=1 // pred_fallthru
      _
    // Predicated region
    $region22: #{tpu_custom_call.1} parent=1 // pred_check
      _
    $region23: #{tpu_custom_call.1} parent=1 // pred_check_branch
      %47 = sbr.rel (0) target = $region25
    $region24: #{tpu_custom_call.1} parent=1 // pred_region
      %49 = dma.done [#allocation6], 3456
    $region25: #{tpu_custom_call.1} parent=1 // pred_fallthru
      _
    %v50 = vld [vmem:[%s0] sm:$0xff]
    %v51 = vld [vmem:[%s0 + $0x8] sm:$0xff]
    %v52 = vld [vmem:[#allocation5] sm:$0xff]
    %v53 = vld [vmem:[#allocation5 + $0x8] sm:$0xff]
    %v54 = vld [vmem:[#allocation5 + $0x10] sm:$0xff]
    %v55 = vld [vmem:[#allocation5 + $0x18] sm:$0xff]
    %v56 = vld [vmem:[#allocation5 + $0x20] sm:$0xff]
    %v57 = vld [vmem:[#allocation5 + $0x28] sm:$0xff]
    %v58 = vld [vmem:[#allocation5 + $0x30] sm:$0xff]
    %v59 = vld [vmem:[#allocation5 + $0x38] sm:$0xff]
    %v60 = vld [vmem:[#allocation5 + $0x40] sm:$0xff]
    %v61 = vld [vmem:[#allocation5 + $0x48] sm:$0xff]
    %v62 = vld [vmem:[#allocation5 + $0x50] sm:$0xff]
    %v63 = vld [vmem:[#allocation5 + $0x58] sm:$0xff]
    %v64 = vld [vmem:[#allocation5 + $0x60] sm:$0xff]
    %v65 = vld [vmem:[#allocation5 + $0x68] sm:$0xff]
    %v66 = vld [vmem:[#allocation5 + $0x70] sm:$0xff]
    %v67 = vld [vmem:[#allocation5 + $0x78] sm:$0xff]
    %v68 = vld [vmem:[#allocation5 + $0x80] sm:$0xff]
    %v69 = vld [vmem:[#allocation5 + $0x88] sm:$0xff]
    %v70 = vld [vmem:[#allocation5 + $0x90] sm:$0xff]
    %v71 = vld [vmem:[#allocation5 + $0x98] sm:$0xff]
    %v72 = vld [vmem:[#allocation5 + $0xa0] sm:$0xff]
    %v73 = vld [vmem:[#allocation5 + $0xa8] sm:$0xff]
    %v74 = vld [vmem:[#allocation5 + $0xb0] sm:$0xff]
    %v75 = vld [vmem:[#allocation5 + $0xb8] sm:$0xff]
    %v76 = vld [vmem:[#allocation5 + $0xc0] sm:$0xff]
    %v77 = vld [vmem:[#allocation5 + $0xc8] sm:$0xff]
    %v78 = vld [vmem:[#allocation5 + $0xd0] sm:$0xff]
    %vm79 = vcmask 588800
    %v81 = vsel %vm79, %v50, 0
    %v84 = vsel %vm79, %v51, 0
    %86 = vmatpush.msra.mxu0 0.0
    %87 = vmatpush.msra.mxu0 0.0
    %88 = vmatpush.msra.mxu0 0.0
    %89 = vmatpush.msra.mxu0 0.0
    %90 = vmatpush.msra.mxu0 0.0
    %91 = vmatpush.msra.mxu0 0.0
    %92 = vmatpush.msra.mxu0 0.0
    %v93 = vand.u32 %v76, 4294901760
    %94 = vmatpush.msra.mxu0 %v93
    %v95 = vand.u32 %v73, 4294901760
    %96 = vmatpush.msra.mxu0 %v95
    %v97 = vand.u32 %v70, 4294901760
    %98 = vmatpush.msra.mxu0 %v97
    %v99 = vand.u32 %v67, 4294901760
    %100 = vmatpush.msra.mxu0 %v99
    %v101 = vand.u32 %v64, 4294901760
    %102 = vmatpush.msra.mxu0 %v101
    %v103 = vand.u32 %v61, 4294901760
    %104 = vmatpush.msra.mxu0 %v103
    %v105 = vand.u32 %v58, 4294901760
    %106 = vmatpush.msra.mxu0 %v105
    %v107 = vand.u32 %v55, 4294901760
    %108 = vmatpush.msra.mxu0 %v107
    %v109 = vand.u32 %v52, 4294901760
    %110 = vmatpush.msra.mxu0 %v109
    %v111 = vand.u32 %v81, 4294901760
    %v112 = vsub.f32 %v81, %v111
    %v113 = vand.u32 %v112, 4294901760
    %v114 = vsub.f32 %v112, %v113
    %v115 = vand.u32 %v114, 4294901760
    %116 = vmatmul.f32.gmra.mxu0 %v115
    %v117 = vpop.f32.mrf.mxu0
    %v118 = vadd.f32 0.0, %v117
    %v119 = vand.u32 %v84, 4294901760
    %v120 = vsub.f32 %v84, %v119
    %v121 = vand.u32 %v120, 4294901760
    %v122 = vsub.f32 %v120, %v121
    %v123 = vand.u32 %v122, 4294901760
    %124 = vmatmul.f32.gmra.mxu0 %v123
    %v125 = vpop.f32.mrf.mxu0
    %v126 = vadd.f32 0.0, %v125
    %127 = vdwg.mxu0
    %128 = vmatpush.msra.mxu0 0.0
    %129 = vmatpush.msra.mxu0 0.0
    %130 = vmatpush.msra.mxu0 0.0
    %131 = vmatpush.msra.mxu0 0.0
    %132 = vmatpush.msra.mxu0 0.0
    %133 = vmatpush.msra.mxu0 0.0
    %134 = vmatpush.msra.mxu0 0.0
    %v135 = vand.u32 %v76, 4294901760
    %v136 = vsub.f32 %v76, %v135
    %v137 = vand.u32 %v136, 4294901760
    %v138 = vsub.f32 %v136, %v137
    %v139 = vand.u32 %v138, 4294901760
    %140 = vmatpush.msra.mxu0 %v139
    %v141 = vand.u32 %v73, 4294901760
    %v142 = vsub.f32 %v73, %v141
    %v143 = vand.u32 %v142, 4294901760
    %v144 = vsub.f32 %v142, %v143
    %v145 = vand.u32 %v144, 4294901760
    %146 = vmatpush.msra.mxu0 %v145
    %v147 = vand.u32 %v70, 4294901760
    %v148 = vsub.f32 %v70, %v147
    %v149 = vand.u32 %v148, 4294901760
    %v150 = vsub.f32 %v148, %v149
    %v151 = vand.u32 %v150, 4294901760
    %152 = vmatpush.msra.mxu0 %v151
    %v153 = vand.u32 %v67, 4294901760
    %v154 = vsub.f32 %v67, %v153
    %v155 = vand.u32 %v154, 4294901760
    %v156 = vsub.f32 %v154, %v155
    %v157 = vand.u32 %v156, 4294901760
    %158 = vmatpush.msra.mxu0 %v157
    %v159 = vand.u32 %v64, 4294901760
    %v160 = vsub.f32 %v64, %v159
    %v161 = vand.u32 %v160, 4294901760
    %v162 = vsub.f32 %v160, %v161
    %v163 = vand.u32 %v162, 4294901760
    %164 = vmatpush.msra.mxu0 %v163
    %v165 = vand.u32 %v61, 4294901760
    %v166 = vsub.f32 %v61, %v165
    %v167 = vand.u32 %v166, 4294901760
    %v168 = vsub.f32 %v166, %v167
    %v169 = vand.u32 %v168, 4294901760
    %170 = vmatpush.msra.mxu0 %v169
    %v171 = vand.u32 %v58, 4294901760
    %v172 = vsub.f32 %v58, %v171
    %v173 = vand.u32 %v172, 4294901760
    %v174 = vsub.f32 %v172, %v173
    %v175 = vand.u32 %v174, 4294901760
    %176 = vmatpush.msra.mxu0 %v175
    %v177 = vand.u32 %v55, 4294901760
    %v178 = vsub.f32 %v55, %v177
    %v179 = vand.u32 %v178, 4294901760
    %v180 = vsub.f32 %v178, %v179
    %v181 = vand.u32 %v180, 4294901760
    %182 = vmatpush.msra.mxu0 %v181
    %v183 = vand.u32 %v52, 4294901760
    %v184 = vsub.f32 %v52, %v183
    %v185 = vand.u32 %v184, 4294901760
    %v186 = vsub.f32 %v184, %v185
    %v187 = vand.u32 %v186, 4294901760
    %188 = vmatpush.msra.mxu0 %v187
    %v189 = vand.u32 %v81, 4294901760
    %190 = vmatmul.f32.gmra.mxu0 %v189
    %v191 = vpop.f32.mrf.mxu0
    %v192 = vadd.f32 %v118, %v191
    %v193 = vand.u32 %v84, 4294901760
    %194 = vmatmul.f32.gmra.mxu0 %v193
    %v195 = vpop.f32.mrf.mxu0
    %v196 = vadd.f32 %v126, %v195
    %197 = vdwg.mxu0
    %198 = vmatpush.msra.mxu0 0.0
    %199 = vmatpush.msra.mxu0 0.0
    %200 = vmatpush.msra.mxu0 0.0
    %201 = vmatpush.msra.mxu0 0.0
    %202 = vmatpush.msra.mxu0 0.0
    %203 = vmatpush.msra.mxu0 0.0
    %204 = vmatpush.msra.mxu0 0.0
    %v205 = vand.u32 %v76, 4294901760
    %v206 = vsub.f32 %v76, %v205
    %207 = vmatpush.msra.mxu0 %v206
    %v208 = vand.u32 %v73, 4294901760
    %v209 = vsub.f32 %v73, %v208
    %210 = vmatpush.msra.mxu0 %v209
    %v211 = vand.u32 %v70, 4294901760
    %v212 = vsub.f32 %v70, %v211
    %213 = vmatpush.msra.mxu0 %v212
    %v214 = vand.u32 %v67, 4294901760
    %v215 = vsub.f32 %v67, %v214
    %216 = vmatpush.msra.mxu0 %v215
    %v217 = vand.u32 %v64, 4294901760
    %v218 = vsub.f32 %v64, %v217
    %219 = vmatpush.msra.mxu0 %v218
    %v220 = vand.u32 %v61, 4294901760
    %v221 = vsub.f32 %v61, %v220
    %222 = vmatpush.msra.mxu0 %v221
    %v223 = vand.u32 %v58, 4294901760
    %v224 = vsub.f32 %v58, %v223
    %225 = vmatpush.msra.mxu0 %v224
    %v226 = vand.u32 %v55, 4294901760
    %v227 = vsub.f32 %v55, %v226
    %228 = vmatpush.msra.mxu0 %v227
    %v229 = vand.u32 %v52, 4294901760
    %v230 = vsub.f32 %v52, %v229
    %231 = vmatpush.msra.mxu0 %v230
    %v232 = vand.u32 %v81, 4294901760
    %v233 = vsub.f32 %v81, %v232
    %234 = vmatmul.f32.gmra.mxu0 %v233
    %v235 = vpop.f32.mrf.mxu0
    %v236 = vadd.f32 %v192, %v235
    %v237 = vand.u32 %v84, 4294901760
    %v238 = vsub.f32 %v84, %v237
    %239 = vmatmul.f32.gmra.mxu0 %v238
    %v240 = vpop.f32.mrf.mxu0
    %v241 = vadd.f32 %v196, %v240
    %242 = vdwg.mxu0
    %243 = vmatpush.msra.mxu0 0.0
    %244 = vmatpush.msra.mxu0 0.0
    %245 = vmatpush.msra.mxu0 0.0
    %246 = vmatpush.msra.mxu0 0.0
    %247 = vmatpush.msra.mxu0 0.0
    %248 = vmatpush.msra.mxu0 0.0
    %249 = vmatpush.msra.mxu0 0.0
    %v250 = vand.u32 %v76, 4294901760
    %251 = vmatpush.msra.mxu0 %v250
    %v252 = vand.u32 %v73, 4294901760
    %253 = vmatpush.msra.mxu0 %v252
    %v254 = vand.u32 %v70, 4294901760
    %255 = vmatpush.msra.mxu0 %v254
    %v256 = vand.u32 %v67, 4294901760
    %257 = vmatpush.msra.mxu0 %v256
    %v258 = vand.u32 %v64, 4294901760
    %259 = vmatpush.msra.mxu0 %v258
    %v260 = vand.u32 %v61, 4294901760
    %261 = vmatpush.msra.mxu0 %v260
    %v262 = vand.u32 %v58, 4294901760
    %263 = vmatpush.msra.mxu0 %v262
    %v264 = vand.u32 %v55, 4294901760
    %265 = vmatpush.msra.mxu0 %v264
    %v266 = vand.u32 %v52, 4294901760
    %267 = vmatpush.msra.mxu0 %v266
    %v268 = vand.u32 %v81, 4294901760
    %v269 = vsub.f32 %v81, %v268
    %v270 = vand.u32 %v269, 4294901760
    %271 = vmatmul.f32.gmra.mxu0 %v270
    %v272 = vpop.f32.mrf.mxu0
    %v273 = vadd.f32 %v236, %v272
    %v274 = vand.u32 %v84, 4294901760
    %v275 = vsub.f32 %v84, %v274
    %v276 = vand.u32 %v275, 4294901760
    %277 = vmatmul.f32.gmra.mxu0 %v276
    %v278 = vpop.f32.mrf.mxu0
    %v279 = vadd.f32 %v241, %v278
    %280 = vdwg.mxu0
    %281 = vmatpush.msra.mxu0 0.0
    %282 = vmatpush.msra.mxu0 0.0
    %283 = vmatpush.msra.mxu0 0.0
    %284 = vmatpush.msra.mxu0 0.0
    %285 = vmatpush.msra.mxu0 0.0
    %286 = vmatpush.msra.mxu0 0.0
    %287 = vmatpush.msra.mxu0 0.0
    %v288 = vand.u32 %v76, 4294901760
    %v289 = vsub.f32 %v76, %v288
    %v290 = vand.u32 %v289, 4294901760
    %291 = vmatpush.msra.mxu0 %v290
    %v292 = vand.u32 %v73, 4294901760
    %v293 = vsub.f32 %v73, %v292
    %v294 = vand.u32 %v293, 4294901760
    %295 = vmatpush.msra.mxu0 %v294
    %v296 = vand.u32 %v70, 4294901760
    %v297 = vsub.f32 %v70, %v296
    %v298 = vand.u32 %v297, 4294901760
    %299 = vmatpush.msra.mxu0 %v298
    %v300 = vand.u32 %v67, 4294901760
    %v301 = vsub.f32 %v67, %v300
    %v302 = vand.u32 %v301, 4294901760
    %303 = vmatpush.msra.mxu0 %v302
    %v304 = vand.u32 %v64, 4294901760
    %v305 = vsub.f32 %v64, %v304
    %v306 = vand.u32 %v305, 4294901760
    %307 = vmatpush.msra.mxu0 %v306
    %v308 = vand.u32 %v61, 4294901760
    %v309 = vsub.f32 %v61, %v308
    %v310 = vand.u32 %v309, 4294901760
    %311 = vmatpush.msra.mxu0 %v310
    %v312 = vand.u32 %v58, 4294901760
    %v313 = vsub.f32 %v58, %v312
    %v314 = vand.u32 %v313, 4294901760
    %315 = vmatpush.msra.mxu0 %v314
    %v316 = vand.u32 %v55, 4294901760
    %v317 = vsub.f32 %v55, %v316
    %v318 = vand.u32 %v317, 4294901760
    %319 = vmatpush.msra.mxu0 %v318
    %v320 = vand.u32 %v52, 4294901760
    %v321 = vsub.f32 %v52, %v320
    %v322 = vand.u32 %v321, 4294901760
    %323 = vmatpush.msra.mxu0 %v322
    %v324 = vand.u32 %v81, 4294901760
    %325 = vmatmul.f32.gmra.mxu0 %v324
    %v326 = vpop.f32.mrf.mxu0
    %v327 = vadd.f32 %v273, %v326
    %v328 = vand.u32 %v84, 4294901760
    %329 = vmatmul.f32.gmra.mxu0 %v328
    %v330 = vpop.f32.mrf.mxu0
    %v331 = vadd.f32 %v279, %v330
    %332 = vdwg.mxu0
    %333 = vmatpush.msra.mxu0 0.0
    %334 = vmatpush.msra.mxu0 0.0
    %335 = vmatpush.msra.mxu0 0.0
    %336 = vmatpush.msra.mxu0 0.0
    %337 = vmatpush.msra.mxu0 0.0
    %338 = vmatpush.msra.mxu0 0.0
    %339 = vmatpush.msra.mxu0 0.0
    %v340 = vand.u32 %v76, 4294901760
    %341 = vmatpush.msra.mxu0 %v340
    %v342 = vand.u32 %v73, 4294901760
    %343 = vmatpush.msra.mxu0 %v342
    %v344 = vand.u32 %v70, 4294901760
    %345 = vmatpush.msra.mxu0 %v344
    %v346 = vand.u32 %v67, 4294901760
    %347 = vmatpush.msra.mxu0 %v346
    %v348 = vand.u32 %v64, 4294901760
    %349 = vmatpush.msra.mxu0 %v348
    %v350 = vand.u32 %v61, 4294901760
    %351 = vmatpush.msra.mxu0 %v350
    %v352 = vand.u32 %v58, 4294901760
    %353 = vmatpush.msra.mxu0 %v352
    %v354 = vand.u32 %v55, 4294901760
    %355 = vmatpush.msra.mxu0 %v354
    %v356 = vand.u32 %v52, 4294901760
    %357 = vmatpush.msra.mxu0 %v356
    %v358 = vand.u32 %v81, 4294901760
    %359 = vmatmul.f32.gmra.mxu0 %v358
    %v360 = vpop.f32.mrf.mxu0
    %v361 = vadd.f32 %v327, %v360
    %v362 = vand.u32 %v84, 4294901760
    %363 = vmatmul.f32.gmra.mxu0 %v362
    %v364 = vpop.f32.mrf.mxu0
    %v365 = vadd.f32 %v331, %v364
    %366 = vdwg.mxu0
    %367 = vmatpush.msra.mxu0 0.0
    %368 = vmatpush.msra.mxu0 0.0
    %369 = vmatpush.msra.mxu0 0.0
    %370 = vmatpush.msra.mxu0 0.0
    %371 = vmatpush.msra.mxu0 0.0
    %372 = vmatpush.msra.mxu0 0.0
    %373 = vmatpush.msra.mxu0 0.0
    %v374 = vand.u32 %v77, 4294901760
    %375 = vmatpush.msra.mxu0 %v374
    %v376 = vand.u32 %v74, 4294901760
    %377 = vmatpush.msra.mxu0 %v376
    %v378 = vand.u32 %v71, 4294901760
    %379 = vmatpush.msra.mxu0 %v378
    %v380 = vand.u32 %v68, 4294901760
    %381 = vmatpush.msra.mxu0 %v380
    %v382 = vand.u32 %v65, 4294901760
    %383 = vmatpush.msra.mxu0 %v382
    %v384 = vand.u32 %v62, 4294901760
    %385 = vmatpush.msra.mxu0 %v384
    %v386 = vand.u32 %v59, 4294901760
    %387 = vmatpush.msra.mxu0 %v386
    %v388 = vand.u32 %v56, 4294901760
    %389 = vmatpush.msra.mxu0 %v388
    %v390 = vand.u32 %v53, 4294901760
    %391 = vmatpush.msra.mxu0 %v390
    %v392 = vand.u32 %v81, 4294901760
    %v393 = vsub.f32 %v81, %v392
    %v394 = vand.u32 %v393, 4294901760
    %v395 = vsub.f32 %v393, %v394
    %v396 = vand.u32 %v395, 4294901760
    %397 = vmatmul.f32.gmra.mxu0 %v396
    %v398 = vpop.f32.mrf.mxu0
    %v399 = vadd.f32 0.0, %v398
    %v400 = vand.u32 %v84, 4294901760
    %v401 = vsub.f32 %v84, %v400
    %v402 = vand.u32 %v401, 4294901760
    %v403 = vsub.f32 %v401, %v402
    %v404 = vand.u32 %v403, 4294901760
    %405 = vmatmul.f32.gmra.mxu0 %v404
    %v406 = vpop.f32.mrf.mxu0
    %v407 = vadd.f32 0.0, %v406
    %408 = vdwg.mxu0
    %409 = vmatpush.msra.mxu0 0.0
    %410 = vmatpush.msra.mxu0 0.0
    %411 = vmatpush.msra.mxu0 0.0
    %412 = vmatpush.msra.mxu0 0.0
    %413 = vmatpush.msra.mxu0 0.0
    %414 = vmatpush.msra.mxu0 0.0
    %415 = vmatpush.msra.mxu0 0.0
    %v416 = vand.u32 %v77, 4294901760
    %v417 = vsub.f32 %v77, %v416
    %v418 = vand.u32 %v417, 4294901760
    %v419 = vsub.f32 %v417, %v418
    %v420 = vand.u32 %v419, 4294901760
    %421 = vmatpush.msra.mxu0 %v420
    %v422 = vand.u32 %v74, 4294901760
    %v423 = vsub.f32 %v74, %v422
    %v424 = vand.u32 %v423, 4294901760
    %v425 = vsub.f32 %v423, %v424
    %v426 = vand.u32 %v425, 4294901760
    %427 = vmatpush.msra.mxu0 %v426
    %v428 = vand.u32 %v71, 4294901760
    %v429 = vsub.f32 %v71, %v428
    %v430 = vand.u32 %v429, 4294901760
    %v431 = vsub.f32 %v429, %v430
    %v432 = vand.u32 %v431, 4294901760
    %433 = vmatpush.msra.mxu0 %v432
    %v434 = vand.u32 %v68, 4294901760
    %v435 = vsub.f32 %v68, %v434
    %v436 = vand.u32 %v435, 4294901760
    %v437 = vsub.f32 %v435, %v436
    %v438 = vand.u32 %v437, 4294901760
    %439 = vmatpush.msra.mxu0 %v438
    %v440 = vand.u32 %v65, 4294901760
    %v441 = vsub.f32 %v65, %v440
    %v442 = vand.u32 %v441, 4294901760
    %v443 = vsub.f32 %v441, %v442
    %v444 = vand.u32 %v443, 4294901760
    %445 = vmatpush.msra.mxu0 %v444
    %v446 = vand.u32 %v62, 4294901760
    %v447 = vsub.f32 %v62, %v446
    %v448 = vand.u32 %v447, 4294901760
    %v449 = vsub.f32 %v447, %v448
    %v450 = vand.u32 %v449, 4294901760
    %451 = vmatpush.msra.mxu0 %v450
    %v452 = vand.u32 %v59, 4294901760
    %v453 = vsub.f32 %v59, %v452
    %v454 = vand.u32 %v453, 4294901760
    %v455 = vsub.f32 %v453, %v454
    %v456 = vand.u32 %v455, 4294901760
    %457 = vmatpush.msra.mxu0 %v456
    %v458 = vand.u32 %v56, 4294901760
    %v459 = vsub.f32 %v56, %v458
    %v460 = vand.u32 %v459, 4294901760
    %v461 = vsub.f32 %v459, %v460
    %v462 = vand.u32 %v461, 4294901760
    %463 = vmatpush.msra.mxu0 %v462
    %v464 = vand.u32 %v53, 4294901760
    %v465 = vsub.f32 %v53, %v464
    %v466 = vand.u32 %v465, 4294901760
    %v467 = vsub.f32 %v465, %v466
    %v468 = vand.u32 %v467, 4294901760
    %469 = vmatpush.msra.mxu0 %v468
    %v470 = vand.u32 %v81, 4294901760
    %471 = vmatmul.f32.gmra.mxu0 %v470
    %v472 = vpop.f32.mrf.mxu0
    %v473 = vadd.f32 %v399, %v472
    %v474 = vand.u32 %v84, 4294901760
    %475 = vmatmul.f32.gmra.mxu0 %v474
    %v476 = vpop.f32.mrf.mxu0
    %v477 = vadd.f32 %v407, %v476
    %478 = vdwg.mxu0
    %479 = vmatpush.msra.mxu0 0.0
    %480 = vmatpush.msra.mxu0 0.0
    %481 = vmatpush.msra.mxu0 0.0
    %482 = vmatpush.msra.mxu0 0.0
    %483 = vmatpush.msra.mxu0 0.0
    %484 = vmatpush.msra.mxu0 0.0
    %485 = vmatpush.msra.mxu0 0.0
    %v486 = vand.u32 %v77, 4294901760
    %v487 = vsub.f32 %v77, %v486
    %488 = vmatpush.msra.mxu0 %v487
    %v489 = vand.u32 %v74, 4294901760
    %v490 = vsub.f32 %v74, %v489
    %491 = vmatpush.msra.mxu0 %v490
    %v492 = vand.u32 %v71, 4294901760
    %v493 = vsub.f32 %v71, %v492
    %494 = vmatpush.msra.mxu0 %v493
    %v495 = vand.u32 %v68, 4294901760
    %v496 = vsub.f32 %v68, %v495
    %497 = vmatpush.msra.mxu0 %v496
    %v498 = vand.u32 %v65, 4294901760
    %v499 = vsub.f32 %v65, %v498
    %500 = vmatpush.msra.mxu0 %v499
    %v501 = vand.u32 %v62, 4294901760
    %v502 = vsub.f32 %v62, %v501
    %503 = vmatpush.msra.mxu0 %v502
    %v504 = vand.u32 %v59, 4294901760
    %v505 = vsub.f32 %v59, %v504
    %506 = vmatpush.msra.mxu0 %v505
    %v507 = vand.u32 %v56, 4294901760
    %v508 = vsub.f32 %v56, %v507
    %509 = vmatpush.msra.mxu0 %v508
    %v510 = vand.u32 %v53, 4294901760
    %v511 = vsub.f32 %v53, %v510
    %512 = vmatpush.msra.mxu0 %v511
    %v513 = vand.u32 %v81, 4294901760
    %v514 = vsub.f32 %v81, %v513
    %515 = vmatmul.f32.gmra.mxu0 %v514
    %v516 = vpop.f32.mrf.mxu0
    %v517 = vadd.f32 %v473, %v516
    %v518 = vand.u32 %v84, 4294901760
    %v519 = vsub.f32 %v84, %v518
    %520 = vmatmul.f32.gmra.mxu0 %v519
    %v521 = vpop.f32.mrf.mxu0
    %v522 = vadd.f32 %v477, %v521
    %523 = vdwg.mxu0
    %524 = vmatpush.msra.mxu0 0.0
    %525 = vmatpush.msra.mxu0 0.0
    %526 = vmatpush.msra.mxu0 0.0
    %527 = vmatpush.msra.mxu0 0.0
    %528 = vmatpush.msra.mxu0 0.0
    %529 = vmatpush.msra.mxu0 0.0
    %530 = vmatpush.msra.mxu0 0.0
    %v531 = vand.u32 %v77, 4294901760
    %532 = vmatpush.msra.mxu0 %v531
    %v533 = vand.u32 %v74, 4294901760
    %534 = vmatpush.msra.mxu0 %v533
    %v535 = vand.u32 %v71, 4294901760
    %536 = vmatpush.msra.mxu0 %v535
    %v537 = vand.u32 %v68, 4294901760
    %538 = vmatpush.msra.mxu0 %v537
    %v539 = vand.u32 %v65, 4294901760
    %540 = vmatpush.msra.mxu0 %v539
    %v541 = vand.u32 %v62, 4294901760
    %542 = vmatpush.msra.mxu0 %v541
    %v543 = vand.u32 %v59, 4294901760
    %544 = vmatpush.msra.mxu0 %v543
    %v545 = vand.u32 %v56, 4294901760
    %546 = vmatpush.msra.mxu0 %v545
    %v547 = vand.u32 %v53, 4294901760
    %548 = vmatpush.msra.mxu0 %v547
    %v549 = vand.u32 %v81, 4294901760
    %v550 = vsub.f32 %v81, %v549
    %v551 = vand.u32 %v550, 4294901760
    %552 = vmatmul.f32.gmra.mxu0 %v551
    %v553 = vpop.f32.mrf.mxu0
    %v554 = vadd.f32 %v517, %v553
    %v555 = vand.u32 %v84, 4294901760
    %v556 = vsub.f32 %v84, %v555
    %v557 = vand.u32 %v556, 4294901760
    %558 = vmatmul.f32.gmra.mxu0 %v557
    %v559 = vpop.f32.mrf.mxu0
    %v560 = vadd.f32 %v522, %v559
    %561 = vdwg.mxu0
    %562 = vmatpush.msra.mxu0 0.0
    %563 = vmatpush.msra.mxu0 0.0
    %564 = vmatpush.msra.mxu0 0.0
    %565 = vmatpush.msra.mxu0 0.0
    %566 = vmatpush.msra.mxu0 0.0
    %567 = vmatpush.msra.mxu0 0.0
    %568 = vmatpush.msra.mxu0 0.0
    %v569 = vand.u32 %v77, 4294901760
    %v570 = vsub.f32 %v77, %v569
    %v571 = vand.u32 %v570, 4294901760
    %572 = vmatpush.msra.mxu0 %v571
    %v573 = vand.u32 %v74, 4294901760
    %v574 = vsub.f32 %v74, %v573
    %v575 = vand.u32 %v574, 4294901760
    %576 = vmatpush.msra.mxu0 %v575
    %v577 = vand.u32 %v71, 4294901760
    %v578 = vsub.f32 %v71, %v577
    %v579 = vand.u32 %v578, 4294901760
    %580 = vmatpush.msra.mxu0 %v579
    %v581 = vand.u32 %v68, 4294901760
    %v582 = vsub.f32 %v68, %v581
    %v583 = vand.u32 %v582, 4294901760
    %584 = vmatpush.msra.mxu0 %v583
    %v585 = vand.u32 %v65, 4294901760
    %v586 = vsub.f32 %v65, %v585
    %v587 = vand.u32 %v586, 4294901760
    %588 = vmatpush.msra.mxu0 %v587
    %v589 = vand.u32 %v62, 4294901760
    %v590 = vsub.f32 %v62, %v589
    %v591 = vand.u32 %v590, 4294901760
    %592 = vmatpush.msra.mxu0 %v591
    %v593 = vand.u32 %v59, 4294901760
    %v594 = vsub.f32 %v59, %v593
    %v595 = vand.u32 %v594, 4294901760
    %596 = vmatpush.msra.mxu0 %v595
    %v597 = vand.u32 %v56, 4294901760
    %v598 = vsub.f32 %v56, %v597
    %v599 = vand.u32 %v598, 4294901760
    %600 = vmatpush.msra.mxu0 %v599
    %v601 = vand.u32 %v53, 4294901760
    %v602 = vsub.f32 %v53, %v601
    %v603 = vand.u32 %v602, 4294901760
    %604 = vmatpush.msra.mxu0 %v603
    %v605 = vand.u32 %v81, 4294901760
    %606 = vmatmul.f32.gmra.mxu0 %v605
    %v607 = vpop.f32.mrf.mxu0
    %v608 = vadd.f32 %v554, %v607
    %v609 = vand.u32 %v84, 4294901760
    %610 = vmatmul.f32.gmra.mxu0 %v609
    %v611 = vpop.f32.mrf.mxu0
    %v612 = vadd.f32 %v560, %v611
    %613 = vdwg.mxu0
    %614 = vmatpush.msra.mxu0 0.0
    %615 = vmatpush.msra.mxu0 0.0
    %616 = vmatpush.msra.mxu0 0.0
    %617 = vmatpush.msra.mxu0 0.0
    %618 = vmatpush.msra.mxu0 0.0
    %619 = vmatpush.msra.mxu0 0.0
    %620 = vmatpush.msra.mxu0 0.0
    %v621 = vand.u32 %v77, 4294901760
    %622 = vmatpush.msra.mxu0 %v621
    %v623 = vand.u32 %v74, 4294901760
    %624 = vmatpush.msra.mxu0 %v623
    %v625 = vand.u32 %v71, 4294901760
    %626 = vmatpush.msra.mxu0 %v625
    %v627 = vand.u32 %v68, 4294901760
    %628 = vmatpush.msra.mxu0 %v627
    %v629 = vand.u32 %v65, 4294901760
    %630 = vmatpush.msra.mxu0 %v629
    %v631 = vand.u32 %v62, 4294901760
    %632 = vmatpush.msra.mxu0 %v631
    %v633 = vand.u32 %v59, 4294901760
    %634 = vmatpush.msra.mxu0 %v633
    %v635 = vand.u32 %v56, 4294901760
    %636 = vmatpush.msra.mxu0 %v635
    %v637 = vand.u32 %v53, 4294901760
    %638 = vmatpush.msra.mxu0 %v637
    %v639 = vand.u32 %v81, 4294901760
    %640 = vmatmul.f32.gmra.mxu0 %v639
    %v641 = vpop.f32.mrf.mxu0
    %v642 = vadd.f32 %v608, %v641
    %v643 = vand.u32 %v84, 4294901760
    %644 = vmatmul.f32.gmra.mxu0 %v643
    %v645 = vpop.f32.mrf.mxu0
    %v646 = vadd.f32 %v612, %v645
    %647 = vdwg.mxu0
    %648 = vmatpush.msra.mxu0 0.0
    %649 = vmatpush.msra.mxu0 0.0
    %650 = vmatpush.msra.mxu0 0.0
    %651 = vmatpush.msra.mxu0 0.0
    %652 = vmatpush.msra.mxu0 0.0
    %653 = vmatpush.msra.mxu0 0.0
    %654 = vmatpush.msra.mxu0 0.0
    %v655 = vand.u32 %v78, 4294901760
    %656 = vmatpush.msra.mxu0 %v655
    %v657 = vand.u32 %v75, 4294901760
    %658 = vmatpush.msra.mxu0 %v657
    %v659 = vand.u32 %v72, 4294901760
    %660 = vmatpush.msra.mxu0 %v659
    %v661 = vand.u32 %v69, 4294901760
    %662 = vmatpush.msra.mxu0 %v661
    %v663 = vand.u32 %v66, 4294901760
    %664 = vmatpush.msra.mxu0 %v663
    %v665 = vand.u32 %v63, 4294901760
    %666 = vmatpush.msra.mxu0 %v665
    %v667 = vand.u32 %v60, 4294901760
    %668 = vmatpush.msra.mxu0 %v667
    %v669 = vand.u32 %v57, 4294901760
    %670 = vmatpush.msra.mxu0 %v669
    %v671 = vand.u32 %v54, 4294901760
    %672 = vmatpush.msra.mxu0 %v671
    %v673 = vand.u32 %v81, 4294901760
    %v674 = vsub.f32 %v81, %v673
    %v675 = vand.u32 %v674, 4294901760
    %v676 = vsub.f32 %v674, %v675
    %v677 = vand.u32 %v676, 4294901760
    %678 = vmatmul.f32.gmra.mxu0 %v677
    %v679 = vpop.f32.mrf.mxu0
    %v680 = vadd.f32 0.0, %v679
    %v681 = vand.u32 %v84, 4294901760
    %v682 = vsub.f32 %v84, %v681
    %v683 = vand.u32 %v682, 4294901760
    %v684 = vsub.f32 %v682, %v683
    %v685 = vand.u32 %v684, 4294901760
    %686 = vmatmul.f32.gmra.mxu0 %v685
    %v687 = vpop.f32.mrf.mxu0
    %v688 = vadd.f32 0.0, %v687
    %689 = vdwg.mxu0
    %690 = vmatpush.msra.mxu0 0.0
    %691 = vmatpush.msra.mxu0 0.0
    %692 = vmatpush.msra.mxu0 0.0
    %693 = vmatpush.msra.mxu0 0.0
    %694 = vmatpush.msra.mxu0 0.0
    %695 = vmatpush.msra.mxu0 0.0
    %696 = vmatpush.msra.mxu0 0.0
    %v697 = vand.u32 %v78, 4294901760
    %v698 = vsub.f32 %v78, %v697
    %v699 = vand.u32 %v698, 4294901760
    %v700 = vsub.f32 %v698, %v699
    %v701 = vand.u32 %v700, 4294901760
    %702 = vmatpush.msra.mxu0 %v701
    %v703 = vand.u32 %v75, 4294901760
    %v704 = vsub.f32 %v75, %v703
    %v705 = vand.u32 %v704, 4294901760
    %v706 = vsub.f32 %v704, %v705
    %v707 = vand.u32 %v706, 4294901760
    %708 = vmatpush.msra.mxu0 %v707
    %v709 = vand.u32 %v72, 4294901760
    %v710 = vsub.f32 %v72, %v709
    %v711 = vand.u32 %v710, 4294901760
    %v712 = vsub.f32 %v710, %v711
    %v713 = vand.u32 %v712, 4294901760
    %714 = vmatpush.msra.mxu0 %v713
    %v715 = vand.u32 %v69, 4294901760
    %v716 = vsub.f32 %v69, %v715
    %v717 = vand.u32 %v716, 4294901760
    %v718 = vsub.f32 %v716, %v717
    %v719 = vand.u32 %v718, 4294901760
    %720 = vmatpush.msra.mxu0 %v719
    %v721 = vand.u32 %v66, 4294901760
    %v722 = vsub.f32 %v66, %v721
    %v723 = vand.u32 %v722, 4294901760
    %v724 = vsub.f32 %v722, %v723
    %v725 = vand.u32 %v724, 4294901760
    %726 = vmatpush.msra.mxu0 %v725
    %v727 = vand.u32 %v63, 4294901760
    %v728 = vsub.f32 %v63, %v727
    %v729 = vand.u32 %v728, 4294901760
    %v730 = vsub.f32 %v728, %v729
    %v731 = vand.u32 %v730, 4294901760
    %732 = vmatpush.msra.mxu0 %v731
    %v733 = vand.u32 %v60, 4294901760
    %v734 = vsub.f32 %v60, %v733
    %v735 = vand.u32 %v734, 4294901760
    %v736 = vsub.f32 %v734, %v735
    %v737 = vand.u32 %v736, 4294901760
    %738 = vmatpush.msra.mxu0 %v737
    %v739 = vand.u32 %v57, 4294901760
    %v740 = vsub.f32 %v57, %v739
    %v741 = vand.u32 %v740, 4294901760
    %v742 = vsub.f32 %v740, %v741
    %v743 = vand.u32 %v742, 4294901760
    %744 = vmatpush.msra.mxu0 %v743
    %v745 = vand.u32 %v54, 4294901760
    %v746 = vsub.f32 %v54, %v745
    %v747 = vand.u32 %v746, 4294901760
    %v748 = vsub.f32 %v746, %v747
    %v749 = vand.u32 %v748, 4294901760
    %750 = vmatpush.msra.mxu0 %v749
    %v751 = vand.u32 %v81, 4294901760
    %752 = vmatmul.f32.gmra.mxu0 %v751
    %v753 = vpop.f32.mrf.mxu0
    %v754 = vadd.f32 %v680, %v753
    %v755 = vand.u32 %v84, 4294901760
    %756 = vmatmul.f32.gmra.mxu0 %v755
    %v757 = vpop.f32.mrf.mxu0
    %v758 = vadd.f32 %v688, %v757
    %759 = vdwg.mxu0
    %760 = vmatpush.msra.mxu0 0.0
    %761 = vmatpush.msra.mxu0 0.0
    %762 = vmatpush.msra.mxu0 0.0
    %763 = vmatpush.msra.mxu0 0.0
    %764 = vmatpush.msra.mxu0 0.0
    %765 = vmatpush.msra.mxu0 0.0
    %766 = vmatpush.msra.mxu0 0.0
    %v767 = vand.u32 %v78, 4294901760
    %v768 = vsub.f32 %v78, %v767
    %769 = vmatpush.msra.mxu0 %v768
    %v770 = vand.u32 %v75, 4294901760
    %v771 = vsub.f32 %v75, %v770
    %772 = vmatpush.msra.mxu0 %v771
    %v773 = vand.u32 %v72, 4294901760
    %v774 = vsub.f32 %v72, %v773
    %775 = vmatpush.msra.mxu0 %v774
    %v776 = vand.u32 %v69, 4294901760
    %v777 = vsub.f32 %v69, %v776
    %778 = vmatpush.msra.mxu0 %v777
    %v779 = vand.u32 %v66, 4294901760
    %v780 = vsub.f32 %v66, %v779
    %781 = vmatpush.msra.mxu0 %v780
    %v782 = vand.u32 %v63, 4294901760
    %v783 = vsub.f32 %v63, %v782
    %784 = vmatpush.msra.mxu0 %v783
    %v785 = vand.u32 %v60, 4294901760
    %v786 = vsub.f32 %v60, %v785
    %787 = vmatpush.msra.mxu0 %v786
    %v788 = vand.u32 %v57, 4294901760
    %v789 = vsub.f32 %v57, %v788
    %790 = vmatpush.msra.mxu0 %v789
    %v791 = vand.u32 %v54, 4294901760
    %v792 = vsub.f32 %v54, %v791
    %793 = vmatpush.msra.mxu0 %v792
    %v794 = vand.u32 %v81, 4294901760
    %v795 = vsub.f32 %v81, %v794
    %796 = vmatmul.f32.gmra.mxu0 %v795
    %v797 = vpop.f32.mrf.mxu0
    %v798 = vadd.f32 %v754, %v797
    %v799 = vand.u32 %v84, 4294901760
    %v800 = vsub.f32 %v84, %v799
    %801 = vmatmul.f32.gmra.mxu0 %v800
    %v802 = vpop.f32.mrf.mxu0
    %v803 = vadd.f32 %v758, %v802
    %804 = vdwg.mxu0
    %805 = vmatpush.msra.mxu0 0.0
    %806 = vmatpush.msra.mxu0 0.0
    %807 = vmatpush.msra.mxu0 0.0
    %808 = vmatpush.msra.mxu0 0.0
    %809 = vmatpush.msra.mxu0 0.0
    %810 = vmatpush.msra.mxu0 0.0
    %811 = vmatpush.msra.mxu0 0.0
    %v812 = vand.u32 %v78, 4294901760
    %813 = vmatpush.msra.mxu0 %v812
    %v814 = vand.u32 %v75, 4294901760
    %815 = vmatpush.msra.mxu0 %v814
    %v816 = vand.u32 %v72, 4294901760
    %817 = vmatpush.msra.mxu0 %v816
    %v818 = vand.u32 %v69, 4294901760
    %819 = vmatpush.msra.mxu0 %v818
    %v820 = vand.u32 %v66, 4294901760
    %821 = vmatpush.msra.mxu0 %v820
    %v822 = vand.u32 %v63, 4294901760
    %823 = vmatpush.msra.mxu0 %v822
    %v824 = vand.u32 %v60, 4294901760
    %825 = vmatpush.msra.mxu0 %v824
    %v826 = vand.u32 %v57, 4294901760
    %827 = vmatpush.msra.mxu0 %v826
    %v828 = vand.u32 %v54, 4294901760
    %829 = vmatpush.msra.mxu0 %v828
    %v830 = vand.u32 %v81, 4294901760
    %v831 = vsub.f32 %v81, %v830
    %v832 = vand.u32 %v831, 4294901760
    %833 = vmatmul.f32.gmra.mxu0 %v832
    %v834 = vpop.f32.mrf.mxu0
    %v835 = vadd.f32 %v798, %v834
    %v836 = vand.u32 %v84, 4294901760
    %v837 = vsub.f32 %v84, %v836
    %v838 = vand.u32 %v837, 4294901760
    %839 = vmatmul.f32.gmra.mxu0 %v838
    %v840 = vpop.f32.mrf.mxu0
    %v841 = vadd.f32 %v803, %v840
    %842 = vdwg.mxu0
    %843 = vmatpush.msra.mxu0 0.0
    %844 = vmatpush.msra.mxu0 0.0
    %845 = vmatpush.msra.mxu0 0.0
    %846 = vmatpush.msra.mxu0 0.0
    %847 = vmatpush.msra.mxu0 0.0
    %848 = vmatpush.msra.mxu0 0.0
    %849 = vmatpush.msra.mxu0 0.0
    %v850 = vand.u32 %v78, 4294901760
    %v851 = vsub.f32 %v78, %v850
    %v852 = vand.u32 %v851, 4294901760
    %853 = vmatpush.msra.mxu0 %v852
    %v854 = vand.u32 %v75, 4294901760
    %v855 = vsub.f32 %v75, %v854
    %v856 = vand.u32 %v855, 4294901760
    %857 = vmatpush.msra.mxu0 %v856
    %v858 = vand.u32 %v72, 4294901760
    %v859 = vsub.f32 %v72, %v858
    %v860 = vand.u32 %v859, 4294901760
    %861 = vmatpush.msra.mxu0 %v860
    %v862 = vand.u32 %v69, 4294901760
    %v863 = vsub.f32 %v69, %v862
    %v864 = vand.u32 %v863, 4294901760
    %865 = vmatpush.msra.mxu0 %v864
    %v866 = vand.u32 %v66, 4294901760
    %v867 = vsub.f32 %v66, %v866
    %v868 = vand.u32 %v867, 4294901760
    %869 = vmatpush.msra.mxu0 %v868
    %v870 = vand.u32 %v63, 4294901760
    %v871 = vsub.f32 %v63, %v870
    %v872 = vand.u32 %v871, 4294901760
    %873 = vmatpush.msra.mxu0 %v872
    %v874 = vand.u32 %v60, 4294901760
    %v875 = vsub.f32 %v60, %v874
    %v876 = vand.u32 %v875, 4294901760
    %877 = vmatpush.msra.mxu0 %v876
    %v878 = vand.u32 %v57, 4294901760
    %v879 = vsub.f32 %v57, %v878
    %v880 = vand.u32 %v879, 4294901760
    %881 = vmatpush.msra.mxu0 %v880
    %v882 = vand.u32 %v54, 4294901760
    %v883 = vsub.f32 %v54, %v882
    %v884 = vand.u32 %v883, 4294901760
    %885 = vmatpush.msra.mxu0 %v884
    %v886 = vand.u32 %v81, 4294901760
    %887 = vmatmul.f32.gmra.mxu0 %v886
    %v888 = vpop.f32.mrf.mxu0
    %v889 = vadd.f32 %v835, %v888
    %v890 = vand.u32 %v84, 4294901760
    %891 = vmatmul.f32.gmra.mxu0 %v890
    %v892 = vpop.f32.mrf.mxu0
    %v893 = vadd.f32 %v841, %v892
    %894 = vdwg.mxu0
    %895 = vmatpush.msra.mxu0 0.0
    %896 = vmatpush.msra.mxu0 0.0
    %897 = vmatpush.msra.mxu0 0.0
    %898 = vmatpush.msra.mxu0 0.0
    %899 = vmatpush.msra.mxu0 0.0
    %900 = vmatpush.msra.mxu0 0.0
    %901 = vmatpush.msra.mxu0 0.0
    %v902 = vand.u32 %v78, 4294901760
    %903 = vmatpush.msra.mxu0 %v902
    %v904 = vand.u32 %v75, 4294901760
    %905 = vmatpush.msra.mxu0 %v904
    %v906 = vand.u32 %v72, 4294901760
    %907 = vmatpush.msra.mxu0 %v906
    %v908 = vand.u32 %v69, 4294901760
    %909 = vmatpush.msra.mxu0 %v908
    %v910 = vand.u32 %v66, 4294901760
    %911 = vmatpush.msra.mxu0 %v910
    %v912 = vand.u32 %v63, 4294901760
    %913 = vmatpush.msra.mxu0 %v912
    %v914 = vand.u32 %v60, 4294901760
    %915 = vmatpush.msra.mxu0 %v914
    %v916 = vand.u32 %v57, 4294901760
    %917 = vmatpush.msra.mxu0 %v916
    %v918 = vand.u32 %v54, 4294901760
    %919 = vmatpush.msra.mxu0 %v918
    %v920 = vand.u32 %v81, 4294901760
    %921 = vmatmul.f32.gmra.mxu0 %v920
    %v922 = vpop.f32.mrf.mxu0
    %v923 = vadd.f32 %v889, %v922
    %v924 = vand.u32 %v84, 4294901760
    %925 = vmatmul.f32.gmra.mxu0 %v924
    %v926 = vpop.f32.mrf.mxu0
    %v927 = vadd.f32 %v893, %v926
    %928 = vdwg.mxu0
    %v929 = vxor.u32 %v361, 2147483648
    %v930 = vxor.u32 %v365, 2147483648
    %v931 = vmul.f32 %v929, 1.442695
    %v932 = vpow.pop %v931
    %v933 = vmul.f32 %v930, 1.442695
    %v934 = vpow.pop %v933
    %v935 = vadd.f32 %v932, 1.0
    %v936 = vadd.f32 %v934, 1.0
    %v937 = vrcp.pop %v935
    %v938 = vmul.f32 %v935, %v937
    %v939 = vsub.f32 1.0, %v938
    %v940 = vmul.f32 %v937, %v939
    %v941 = vadd.f32 %v937, %v940
    %vm942 = vweird.f32 %v935
    %vm943 = vweird.f32 %v937
    %vm944 = vmor %vm942, %vm943
    %v945 = vsel %vm944, %v937, %v941
    %v946 = vand.u32 2147483647, %v935
    %vm947 = vcmp.eq.f32.partialorder %v946, 8.507059e+37
    %v948 = vand.u32 %v935, 2147483648
    %v949 = vor.u32 1.1754944e-38, %v948
    %v950 = vsel %vm947, %v949, %v945
    %v951 = vmul.f32 1.0, %v950
    %v952 = vrcp.pop %v936
    %v953 = vmul.f32 %v936, %v952
    %v954 = vsub.f32 1.0, %v953
    %v955 = vmul.f32 %v952, %v954
    %v956 = vadd.f32 %v952, %v955
    %vm957 = vweird.f32 %v936
    %vm958 = vweird.f32 %v952
    %vm959 = vmor %vm957, %vm958
    %v960 = vsel %vm959, %v952, %v956
    %v961 = vand.u32 2147483647, %v936
    %vm962 = vcmp.eq.f32.partialorder %v961, 8.507059e+37
    %v963 = vand.u32 %v936, 2147483648
    %v964 = vor.u32 1.1754944e-38, %v963
    %v965 = vsel %vm962, %v964, %v960
    %v966 = vmul.f32 1.0, %v965
    %v967 = vmul.f32 %v951, %v923
    %v968 = vmul.f32 %v966, %v927
    %v969 = vadd.f32 %v642, %v967
    %v970 = vadd.f32 %v646, %v968
    %v971 = vtanh.pop %v969
    %v972 = vtanh.pop %v970
    %v973 = vld [vmem:[#allocation2] sm:$0xff]
    %v974 = vld [vmem:[#allocation2 + $0x8] sm:$0xff]
    %v975 = vld [vmem:[%s2] sm:$0xff]
    %v976 = vld [vmem:[%s2 + $0x8] sm:$0xff]
    %v977 = vsub.f32 %v971, %v973
    %v978 = vsub.f32 %v972, %v974
    %980 = vset.pattern.permute.xlu0 0
    %981 = vperm.xlu0 %980, %v975
    %v982 = vpop.permute.xlu0 %981
    %985 = vset.pattern.permute.xlu0 0
    %986 = vperm.xlu0 %985, %v976
    %v987 = vpop.permute.xlu0 %986
    %v989 = vmul.f32 %v982, %v977
    %v990 = vmul.f32 %v987, %v978
    %v991 = vadd.f32 %v973, %v989
    %v992 = vadd.f32 %v974, %v990
    %993 = vst [vmem:[#allocation7] sm:$0xff] %v991
    %994 = vst [vmem:[#allocation7 + $0x8] sm:$0xff] %v992
    // Predicated region
    $region26: #{tpu_custom_call.1} parent=1 // pred_check
      _
    $region27: #{tpu_custom_call.1} parent=1 // pred_check_branch
      %996 = sbr.rel (0) target = $region29
    $region28: #{tpu_custom_call.1} parent=1 // pred_region
      %998 = vsyncadd [#allocation4], 0
      %s999 = sshll.u32 [#allocation7], 4
      %s1000 = int_to_ptr.vmem [resolvable:$true] %s999
      %s1001 = sshll.u32 %s4, 4
      %s1002 = int_to_ptr.hbm [resolvable:$true] %s1001
      %1007 = dma.vmem_to_hbm [thread:$0]  %s1000, 256, %s1002, [#allocation4], 128, 128, 8
    $region29: #{tpu_custom_call.1} parent=1 // pred_fallthru
      _
    // Predicated region
    $region30: #{tpu_custom_call.1} parent=1 // pred_check
      _
    $region31: #{tpu_custom_call.1} parent=1 // pred_check_branch
      %1009 = sbr.rel (0) target = $region33
    $region32: #{tpu_custom_call.1} parent=1 // pred_region
      %1011 = dma.done [#allocation4], 256
    $region33: #{tpu_custom_call.1} parent=1 // pred_fallthru
      _
    %1012 = vsyncpa [#allocation3], 1
    %1013 = vsyncpa [#allocation6], 1
    %1014 = vsyncpa [#allocation4], 1

</llo_original>
